<compile_context>
chip_gen: v5e
topology: v5e:2x2
jax: 0.10.0
libtpu: 0.0.40
codegen_flags: <defaults>
</compile_context>

<pallas_src>
import functools

import jax
import jax.numpy as jnp
import numpy as np
from jax.experimental import pallas as pl
from jax.experimental.pallas import tpu as pltpu

ALPHA = 0.5     # penalty on false positives
BETA = 0.5      # penalty on false negatives
EPS = 1e-8      # stability term
MAX_IDS = 4     # static set of candidate instance ids: 1..MAX_IDS
TR_MAX = 8192   # row tile: 2 inputs x 2 pipeline buffers x 8192*128*4B = 16 MiB
VMEM_LIMIT_BYTES = 48 * 1024 * 1024   # safe on v5e/v6e (128 MiB) and v7x (64 MiB)


def _tversky_stats_kernel(pred_ref, gt_ref, out_ref, *,
                          max_ids, n_rows, tr, rows, mask_rows):
    """Grid = (image, row_tile).  pred/gt blocks are (1, TR, 128).

    The output block (1, n_rows, 128) stays VMEM-resident across the row axis
    and holds lane-parallel partial sums:
        row 0      -> sum(pred)
        row 1      -> sum(pred * foreground)          (true positives)
        row 1 + c  -> count(gt == c), c = 1..max_ids  (presence / fg count)
    The cross-lane reduction and the Tversky formula run in plain JAX.
    """
    r = pl.program_id(1)
    n_r = pl.num_programs(1)

    # ---- init the resident output block at the first row tile ----
    @pl.when(r == 0)
    def _init():
        out_ref[...] = jnp.zeros_like(out_ref)

    def _accumulate(mask_tail):
        # Per-vreg casts (no-ops for f32 / int32 inputs, cheap for bf16 / int8).
        pred = pred_ref[0].astype(jnp.float32)          # (TR, 128)
        gt = gt_ref[0].astype(jnp.int32)                 # (TR, 128)

        if mask_tail:
            # Rows >= `rows` hang off the end of the image; Pallas fills that
            # part of the edge block with garbage, so zero it out here.
            row_ids = jax.lax.broadcasted_iota(jnp.int32, (tr, 128), 0) + r * tr
            ok = row_ids < rows
            pred = jnp.where(ok, pred, jnp.float32(0.0))
            gt = jnp.where(ok, gt, 0)

        # Foreground = any candidate instance id (labels outside {0..max_ids}
        # are treated as background, matching the static-candidate-set rule).
        fg = jnp.logical_and(gt >= 1, gt <= max_ids)
        pred_fg = jnp.where(fg, pred, jnp.float32(0.0))

        # Lane-parallel partials: sublane (VPU) reductions only.  All rows are
        # stacked into one (n_rows, 128) value so the accumulator update is a
        # single full-tile read-modify-write instead of six partial stores.
        parts = [jnp.sum(pred, axis=0, keepdims=True),
                 jnp.sum(pred_fg, axis=0, keepdims=True)]
        for c in range(1, max_ids + 1):
            onehot = jnp.where(gt == c, jnp.float32(1.0), jnp.float32(0.0))
            parts.append(jnp.sum(onehot, axis=0, keepdims=True))
        pad_rows = n_rows - (2 + max_ids)
        if pad_rows:
            parts.append(jnp.zeros((pad_rows, 128), jnp.float32))
        update = jnp.concatenate(parts, axis=0)           # (n_rows, 128)

        out_ref[...] = out_ref[...] + update[None, :, :]

    if mask_rows:
        # Only the last row tile pays for the tail mask.
        @pl.when(r == n_r - 1)
        def _masked():
            _accumulate(True)

        @pl.when(r != n_r - 1)
        def _unmasked():
            _accumulate(False)
    else:
        _accumulate(False)


def tversky_loss(pred, gt, *, alpha=ALPHA, beta=BETA, eps=EPS,
                 max_ids=MAX_IDS, tr_max=TR_MAX):
    """pred, gt: (B, 1, X, Y, Z). Returns scalar loss (mean over batch)."""
    B = pred.shape[0]
    S = int(np.prod(pred.shape[1:]))

    # Accept native dtypes (f32 / bf16 pred, int32 / int8 / uint8 gt) so no
    # extra HBM cast pass runs in front of the kernel.
    pred_f = pred.reshape(B, S)
    if pred_f.dtype not in (jnp.float32, jnp.bfloat16):
        pred_f = pred_f.astype(jnp.float32)
    gt_i = gt.reshape(B, S)
    if gt_i.dtype not in (jnp.int32, jnp.int8, jnp.uint8):
        gt_i = gt_i.astype(jnp.int32)

    pad = (-S) % 128
    if pad:
        # TODO(synk): ragged spatial sizes (S % 128 != 0) still pad in HBM
        # (pred=0, gt=0 contributes nothing); the path below is copy-free.
        pred_f = jnp.pad(pred_f, ((0, 0), (0, pad)))
        gt_i = jnp.pad(gt_i, ((0, 0), (0, pad)))
    R = (S + pad) // 128

    # With only a few images, split each image's rows into NS pseudo-images
    # (free reshape; the kernel's raw statistics are additive), so the
    # "parallel" batch grid axis keeps both v7x TensorCores busy.
    NS = 1
    if B < 4:
        for cand in (4, 2):
            if R % cand == 0 and (R // cand) >= 8:
                NS = cand
                break
    R_eff = R // NS
    pred3 = pred_f.reshape(B * NS, R_eff, 128)
    gt3 = gt_i.reshape(B * NS, R_eff, 128)

    # Row tile: the whole (pseudo-)image if small, else TR_MAX rows.
    TR = R_eff if R_eff <= tr_max else tr_max
    n_r = pl.cdiv(R_eff, TR)
    mask_rows = (R_eff % TR) != 0

    n_rows = ((2 + max_ids + 7) // 8) * 8     # pad stats to whole (8,128) tiles
    kernel = functools.partial(
        _tversky_stats_kernel, max_ids=int(max_ids), n_rows=int(n_rows),
        tr=int(TR), rows=int(R_eff), mask_rows=bool(mask_rows))

    # NOTE: verified informally that fg / pred_fg / onehot stay fused with the
    # sublane reductions (no full (TR,128) temporaries) at these tile sizes.
    stats = pl.pallas_call(
        kernel,
        out_shape=jax.ShapeDtypeStruct((B * NS, n_rows, 128), jnp.float32),
        grid=(B * NS, n_r),
        in_specs=[
            pl.BlockSpec((1, TR, 128), lambda b, r: (b, r, 0)),
            pl.BlockSpec((1, TR, 128), lambda b, r: (b, r, 0)),
        ],
        out_specs=pl.BlockSpec((1, n_rows, 128), lambda b, r: (b, 0, 0)),
        compiler_params=pltpu.CompilerParams(
            dimension_semantics=("parallel", "arbitrary"),
            vmem_limit_bytes=VMEM_LIMIT_BYTES),
    )(pred3, gt3)

    # ---- tiny Tversky finalize in plain JAX (per image, then batch mean) ----
    stats = stats.reshape(B, NS, n_rows, 128).sum(axis=(1, 3))   # (B, n_rows)
    sum_pred = stats[:, 0]
    tp = stats[:, 1]
    counts = stats[:, 2:2 + max_ids]                              # (B, max_ids)
    fg_count = jnp.sum(counts, axis=1)
    n_present = jnp.sum((counts > 0).astype(jnp.float32), axis=1)

    # fp_c = sum_pred - tp_c for each PRESENT class; tp_c of absent classes is
    # identically 0 (disjoint integer masks), so the per-class sums collapse:
    fp = (n_present * sum_pred - tp + 1e-10) * alpha
    fn = (fg_count - tp) * beta
    tversky = (tp + eps) / (tp + fp + fn + eps)
    # torch.mean(torch.stack(results))
    return jnp.mean(1.0 - tversky)


def _reference_loss(pred, gt, alpha, beta, eps, max_ids):
    """Pure-JAX reference mirroring the per-class PyTorch semantics."""
    losses = []
    for b in range(pred.shape[0]):
        p = pred[b].reshape(-1).astype(jnp.float32)
        g = gt[b].reshape(-1)
        tp = jnp.float32(0.0)
        fp = jnp.float32(0.0)
        fn = jnp.float32(0.0)
        for c in range(1, max_ids + 1):
            m = (g == c).astype(jnp.float32)
            present = jnp.sum(m) > 0
            tp = tp + jnp.sum(p * m)
            fp = fp + jnp.where(present, jnp.sum(p * (1.0 - m)), 0.0)
            fn = fn + jnp.sum((1.0 - p) * m)
        fp = (fp + 1e-10) * alpha
        fn = fn * beta
        tv = (tp + eps) / (tp + fp + fn + eps)
        losses.append(1.0 - tv)
    return jnp.mean(jnp.stack(losses))


if __name__ == "__main__":
    key = jax.random.PRNGKey(0)
    k1, k2 = jax.random.split(key)

    # TODO(synk): dynamic torch.unique over arbitrary label values has no
    # static-shape Pallas equivalent; labels are assumed to lie in {0..MAX_IDS}.

    # Main check: (B, 1, 16, 16, 16) probabilities + integer instance labels.
    B, C, X, Y, Z = 2, 1, 16, 16, 16
    pred = jax.random.uniform(k1, (B, C, X, Y, Z), dtype=jnp.float32)
    gt = jax.random.randint(k2, (B, C, X, Y, Z), 0, MAX_IDS + 1,
                            dtype=jnp.int32)
    loss = jax.block_until_ready(tversky_loss(pred, gt))
    ref = _reference_loss(pred, gt, ALPHA, BETA, EPS, MAX_IDS)
    np.testing.assert_allclose(np.asarray(loss), np.asarray(ref),
                               rtol=1e-5, atol=1e-5)

    # Second check exercises the pl.when-gated tail-mask path (R_eff % TR != 0)
    # by forcing a small row tile on a non-divisible spatial size.
    B2, X2, Y2, Z2 = 2, 16, 16, 20
    pred2 = jax.random.uniform(k1, (B2, 1, X2, Y2, Z2), dtype=jnp.float32)
    gt2 = jax.random.randint(k2, (B2, 1, X2, Y2, Z2), 0, MAX_IDS + 1,
                             dtype=jnp.int32)
    loss2 = jax.block_until_ready(tversky_loss(pred2, gt2, tr_max=8))
    ref2 = _reference_loss(pred2, gt2, ALPHA, BETA, EPS, MAX_IDS)
    np.testing.assert_allclose(np.asarray(loss2), np.asarray(ref2),
                               rtol=1e-5, atol=1e-5)

    print("KERNEL_OK")
</pallas_src>

<mosaic_0001>
module attributes {stable_mosaic.version = 11 : i64} {
  func.func @_tversky_stats_kernel(%arg0: i32, %arg1: i32, %arg2: memref<1x8x128xf32, #tpu.memory_space<vmem>>, %arg3: memref<1x8x128xi32, #tpu.memory_space<vmem>>, %arg4: memref<1x8x128xf32, #tpu.memory_space<vmem>>) attributes {dimension_semantics = [#tpu.dimension_semantics<parallel>, #tpu.dimension_semantics<arbitrary>], iteration_bounds = array<i64: 8, 1>, scalar_prefetch = 0 : i64, scratch_operands = 0 : i64, tpu.core_type = #tpu.core_type<tc>, window_params = [{transform_indices = @transform_0, window_bounds = array<i64: 1, 8, 128>}, {transform_indices = @transform_1, window_bounds = array<i64: 1, 8, 128>}, {transform_indices = @transform_2, window_bounds = array<i64: 1, 8, 128>}]} {
    %c0_i32 = arith.constant 0 : i32
    %0 = arith.cmpi eq, %arg1, %c0_i32 : i32
    %1 = arith.extui %0 : i1 to i32
    %c0_i32_0 = arith.constant 0 : i32
    %2 = arith.cmpi ne, %1, %c0_i32_0 : i32
    scf.if %2 {
      %cst_29 = arith.constant 0.000000e+00 : f32
      %52 = vector.broadcast %cst_29 : f32 to vector<1x8x128xf32>
      %c0_30 = arith.constant 0 : index
      %c0_31 = arith.constant 0 : index
      %c0_32 = arith.constant 0 : index
      %53 = vector.load %arg4[%c0_30, %c0_31, %c0_32] : memref<1x8x128xf32, #tpu.memory_space<vmem>>, vector<1x8x128xf32>
      tpu.vector_store %arg4[%c0_30, %c0_31, %c0_32], %52 {strides = array<i32>} : memref<1x8x128xf32, #tpu.memory_space<vmem>>, vector<1x8x128xf32>,
    } else {
    }
    %c0 = arith.constant 0 : index
    %c0_1 = arith.constant 0 : index
    %c0_2 = arith.constant 0 : index
    %3 = vector.load %arg2[%c0, %c0_1, %c0_2] : memref<1x8x128xf32, #tpu.memory_space<vmem>>, vector<1x8x128xf32>
    %4 = vector.shape_cast %3 : vector<1x8x128xf32> to vector<8x128xf32>
    %c0_3 = arith.constant 0 : index
    %c0_4 = arith.constant 0 : index
    %c0_5 = arith.constant 0 : index
    %5 = vector.load %arg3[%c0_3, %c0_4, %c0_5] : memref<1x8x128xi32, #tpu.memory_space<vmem>>, vector<1x8x128xi32>
    %6 = vector.shape_cast %5 : vector<1x8x128xi32> to vector<8x128xi32>
    %c1_i32 = arith.constant 1 : i32
    %7 = vector.broadcast %c1_i32 : i32 to vector<8x128xi32>
    %8 = arith.cmpi sge, %6, %7 : vector<8x128xi32>
    %c4_i32 = arith.constant 4 : i32
    %9 = vector.broadcast %c4_i32 : i32 to vector<8x128xi32>
    %10 = arith.cmpi sle, %6, %9 : vector<8x128xi32>
    %11 = arith.andi %8, %10 : vector<8x128xi1>
    %cst = arith.constant 0.000000e+00 : f32
    %12 = vector.broadcast %cst : f32 to vector<8x128xf32>
    %13 = arith.select %11, %4, %12 : vector<8x128xi1>, vector<8x128xf32>
    %cst_6 = arith.constant dense<0.000000e+00> : vector<128xf32>
    %14 = vector.multi_reduction <add>, %4, %cst_6 [0] : vector<8x128xf32> to vector<128xf32>
    %15 = vector.shape_cast %14 : vector<128xf32> to vector<1x128xf32>
    %cst_7 = arith.constant dense<0.000000e+00> : vector<128xf32>
    %16 = vector.multi_reduction <add>, %13, %cst_7 [0] : vector<8x128xf32> to vector<128xf32>
    %17 = vector.shape_cast %16 : vector<128xf32> to vector<1x128xf32>
    %c1_i32_8 = arith.constant 1 : i32
    %18 = vector.broadcast %c1_i32_8 : i32 to vector<8x128xi32>
    %19 = arith.cmpi eq, %6, %18 : vector<8x128xi32>
    %cst_9 = arith.constant 1.000000e+00 : f32
    %cst_10 = arith.constant 0.000000e+00 : f32
    %20 = vector.broadcast %cst_9 : f32 to vector<8x128xf32>
    %21 = vector.broadcast %cst_10 : f32 to vector<8x128xf32>
    %22 = arith.select %19, %20, %21 : vector<8x128xi1>, vector<8x128xf32>
    %cst_11 = arith.constant dense<0.000000e+00> : vector<128xf32>
    %23 = vector.multi_reduction <add>, %22, %cst_11 [0] : vector<8x128xf32> to vector<128xf32>
    %24 = vector.shape_cast %23 : vector<128xf32> to vector<1x128xf32>
    %c2_i32 = arith.constant 2 : i32
    %25 = vector.broadcast %c2_i32 : i32 to vector<8x128xi32>
    %26 = arith.cmpi eq, %6, %25 : vector<8x128xi32>
    %cst_12 = arith.constant 1.000000e+00 : f32
    %cst_13 = arith.constant 0.000000e+00 : f32
    %27 = vector.broadcast %cst_12 : f32 to vector<8x128xf32>
    %28 = vector.broadcast %cst_13 : f32 to vector<8x128xf32>
    %29 = arith.select %26, %27, %28 : vector<8x128xi1>, vector<8x128xf32>
    %cst_14 = arith.constant dense<0.000000e+00> : vector<128xf32>
    %30 = vector.multi_reduction <add>, %29, %cst_14 [0] : vector<8x128xf32> to vector<128xf32>
    %31 = vector.shape_cast %30 : vector<128xf32> to vector<1x128xf32>
    %c3_i32 = arith.constant 3 : i32
    %32 = vector.broadcast %c3_i32 : i32 to vector<8x128xi32>
    %33 = arith.cmpi eq, %6, %32 : vector<8x128xi32>
    %cst_15 = arith.constant 1.000000e+00 : f32
    %cst_16 = arith.constant 0.000000e+00 : f32
    %34 = vector.broadcast %cst_15 : f32 to vector<8x128xf32>
    %35 = vector.broadcast %cst_16 : f32 to vector<8x128xf32>
    %36 = arith.select %33, %34, %35 : vector<8x128xi1>, vector<8x128xf32>
    %cst_17 = arith.constant dense<0.000000e+00> : vector<128xf32>
    %37 = vector.multi_reduction <add>, %36, %cst_17 [0] : vector<8x128xf32> to vector<128xf32>
    %38 = vector.shape_cast %37 : vector<128xf32> to vector<1x128xf32>
    %c4_i32_18 = arith.constant 4 : i32
    %39 = vector.broadcast %c4_i32_18 : i32 to vector<8x128xi32>
    %40 = arith.cmpi eq, %6, %39 : vector<8x128xi32>
    %cst_19 = arith.constant 1.000000e+00 : f32
    %cst_20 = arith.constant 0.000000e+00 : f32
    %41 = vector.broadcast %cst_19 : f32 to vector<8x128xf32>
    %42 = vector.broadcast %cst_20 : f32 to vector<8x128xf32>
    %43 = arith.select %40, %41, %42 : vector<8x128xi1>, vector<8x128xf32>
    %cst_21 = arith.constant dense<0.000000e+00> : vector<128xf32>
    %44 = vector.multi_reduction <add>, %43, %cst_21 [0] : vector<8x128xf32> to vector<128xf32>
    %45 = vector.shape_cast %44 : vector<128xf32> to vector<1x128xf32>
    %cst_22 = arith.constant 0.000000e+00 : f32
    %46 = vector.broadcast %cst_22 : f32 to vector<2x128xf32>
    %47 = tpu.concatenate %15, %17, %24, %31, %38, %45, %46 in 0 : vector<1x128xf32>, vector<1x128xf32>, vector<1x128xf32>, vector<1x128xf32>, vector<1x128xf32>, vector<1x128xf32>, vector<2x128xf32> -> vector<8x128xf32>
    %c0_23 = arith.constant 0 : index
    %c0_24 = arith.constant 0 : index
    %c0_25 = arith.constant 0 : index
    %48 = vector.load %arg4[%c0_23, %c0_24, %c0_25] : memref<1x8x128xf32, #tpu.memory_space<vmem>>, vector<1x8x128xf32>
    %49 = vector.shape_cast %47 : vector<8x128xf32> to vector<1x8x128xf32>
    %50 = arith.addf %48, %49 : vector<1x8x128xf32>
    %c0_26 = arith.constant 0 : index
    %c0_27 = arith.constant 0 : index
    %c0_28 = arith.constant 0 : index
    %51 = vector.load %arg4[%c0_26, %c0_27, %c0_28] : memref<1x8x128xf32, #tpu.memory_space<vmem>>, vector<1x8x128xf32>
    tpu.vector_store %arg4[%c0_26, %c0_27, %c0_28], %50 {strides = array<i32>} : memref<1x8x128xf32, #tpu.memory_space<vmem>>, vector<1x8x128xf32>,
    return
  }
  func.func @transform_0(%arg0: i32, %arg1: i32) -> (i32, i32, i32) {
    %c0_i32 = arith.constant 0 : i32
    %c0_i32_0 = arith.constant 0 : i32
    return %arg0, %arg1, %c0_i32 : i32, i32, i32
  }
  func.func @transform_1(%arg0: i32, %arg1: i32) -> (i32, i32, i32) {
    %c0_i32 = arith.constant 0 : i32
    %c0_i32_0 = arith.constant 0 : i32
    return %arg0, %arg1, %c0_i32 : i32, i32, i32
  }
  func.func @transform_2(%arg0: i32, %arg1: i32) -> (i32, i32, i32) {
    %c0_i32 = arith.constant 0 : i32
    %c0_i32_0 = arith.constant 0 : i32
    %c0_i32_1 = arith.constant 0 : i32
    return %arg0, %c0_i32, %c0_i32_0 : i32, i32, i32
  }
}

</mosaic_0001>

<llo_original>
// kernel: tpu_custom_call.1
$region0: #{tpu_custom_call.1}
  #allocation0 [shape = 'u32[]', space=smem, size = 0x4, offset = 0x4, fixed_abs, tag = 'smem constant byte address 0x4 - core index']
  #allocation1 [shape = 'u32[72,128]{1,0:T(1,128)}', space=vmem, size = 0x9000, scoped, tag = 'internal scratch']
  %s0 = inlined_call_operand.hbm [shape: f32[8,8,128], index: 0, kind: input, shape index: {}]
  %s1 = inlined_call_operand.hbm [shape: s32[8,8,128], index: 1, kind: input, shape index: {}]
  %s2 = inlined_call_operand.hbm [shape: f32[8,8,128], index: 2, kind: output, shape index: {}]
  %s3 = sld [smem:[#allocation0]]
  $region53: #{tpu_custom_call.1} parent=0
    _
  %s5 = ssub.s32 1, %s3
  %s6 = scalar_select 0, %s5, %s3
  $region1: #{tpu_custom_call.1} parent=0
    #allocation2 [shape = 'u8[8192]{0}', space=vmem, size = 0x2000, scoped, tag = 'input window, operand 0']
    #allocation3 [shape = 's32[2]{0}', space=sflag, size = 0x8, scoped, tag = 'scoped memory for tpu_custom_call.1']
    #allocation4 [shape = 's32[2]{0}', space=sflag, size = 0x8, scoped, tag = 'scoped memory for tpu_custom_call.1']
    #allocation5 [shape = 'u8[8192]{0}', space=vmem, size = 0x2000, scoped, tag = 'input window, operand 1']
    #allocation6 [shape = 's32[2]{0}', space=sflag, size = 0x8, scoped, tag = 'scoped memory for tpu_custom_call.1']
    #allocation7 [shape = 'u8[8192]{0}', space=vmem, size = 0x2000, scoped, tag = 'output window, operand 0']
    %7 = vsyncpa [#allocation3], 0
    %s8 = scalar_lea.sflag [#allocation3], 1
    %9 = vsyncpa %s8, 0
    %10 = vsyncpa [#allocation6], 0
    %s11 = scalar_lea.sflag [#allocation6], 1
    %12 = vsyncpa %s11, 0
    %13 = vsyncpa [#allocation4], 0
    %s14 = scalar_lea.sflag [#allocation4], 1
    %15 = vsyncpa %s14, 0
    loop: start=0, step=1, limit=10
    $region2: #{tpu_custom_call.1} parent=1 // loop_pre_header
      _
    $region3: #{tpu_custom_call.1} parent=1 // loop_header
      %s17 = sphi 0, %s21
      %p18 = scmp.ge.s32.totalorder %s17, 10
      %s24 = sphi 0, %s36
      %s25 = sphi 0, %s32
      %s26 = sphi 0, %s24
      %s27 = sphi 0, %s25
      %s28 = sphi 0, %s26
      %s29 = sphi 0, %s27
      %s41 = sphi 0, %s43
      %s44 = sphi 0, %s41
      %s45 = sphi 0, %s44
      %s61 = sphi 0, %s45
      %s69 = sphi 0, %s71
      %s72 = sphi 0, %s69
      %s73 = sphi 0, %s72
      %s89 = sphi 0, %s73
      %s95 = sphi 0, %s97
      %s98 = sphi 0, %s95
      %s99 = sphi 0, %s98
      %s115 = sphi 0, %s99
    $region4: #{tpu_custom_call.1} parent=1 // loop_header_branch
      %20 = sbr.rel (%p18) target = $region8
    $region5: #{tpu_custom_call.1} parent=1 // loop_body
      %s22 = ssub.s32 %s17, 1
      %s23 = ssub.s32 %s17, 2
      %s30 = sadd.s32 1, %s25
      %p31 = scmp.ge.s32.totalorder %s30, 1
      %s32 = scalar_select %p31, 0, %s30
      %s33 = sadd.s32 1, %s24
      %s34 = scalar_select %p31, %s33, %s24
      %p35 = scmp.ge.s32.totalorder %s34, 8
      %s36 = scalar_select %p35, 0, %s34
      %s37 = ssub.s32 %s24, %s36
      %s38 = ssub.s32 %s25, %s32
      %s39 = sor.u32 %s37, %s38
      %p40 = scmp.eq.s32.totalorder %s39, 0
      %s42 = sadd.s32 %s41, 1
      %s43 = scalar_select %p40, %s41, %s42
      %p46 = pneg %p40
      %p47 = scmp.eq.s32.totalorder %s17, 7
      %p48 = por %p46, %p47
      %p49 = scmp.ne.s32.totalorder %s41, %s44
      %p50 = scmp.eq.s32.totalorder %s17, 0
      %p51 = por %p49, %p50
      %p52 = scmp.ne.s32.totalorder %s41, %s44
      %p53 = scmp.eq.s32.totalorder %s22, 7
      %p54 = por %p52, %p53
      %p55 = scmp.ne.s32.totalorder %s44, %s45
      %p56 = scmp.eq.s32.totalorder %s22, 0
      %p57 = por %p55, %p56
      %p58 = scmp.ne.s32.totalorder %s44, %s45
      %p59 = scmp.eq.s32.totalorder %s23, 7
      %p60 = por %p58, %p59
      %p62 = scmp.ne.s32.totalorder %s45, %s61
      %p63 = scmp.eq.s32.totalorder %s23, 0
      %p64 = por %p62, %p63
      %s65 = ssub.s32 %s24, %s36
      %s66 = ssub.s32 %s25, %s32
      %s67 = sor.u32 %s65, %s66
      %p68 = scmp.eq.s32.totalorder %s67, 0
      %s70 = sadd.s32 %s69, 1
      %s71 = scalar_select %p68, %s69, %s70
      %p74 = pneg %p68
      %p75 = scmp.eq.s32.totalorder %s17, 7
      %p76 = por %p74, %p75
      %p77 = scmp.ne.s32.totalorder %s69, %s72
      %p78 = scmp.eq.s32.totalorder %s17, 0
      %p79 = por %p77, %p78
      %p80 = scmp.ne.s32.totalorder %s69, %s72
      %p81 = scmp.eq.s32.totalorder %s22, 7
      %p82 = por %p80, %p81
      %p83 = scmp.ne.s32.totalorder %s72, %s73
      %p84 = scmp.eq.s32.totalorder %s22, 0
      %p85 = por %p83, %p84
      %p86 = scmp.ne.s32.totalorder %s72, %s73
      %p87 = scmp.eq.s32.totalorder %s23, 7
      %p88 = por %p86, %p87
      %p90 = scmp.ne.s32.totalorder %s73, %s89
      %p91 = scmp.eq.s32.totalorder %s23, 0
      %p92 = por %p90, %p91
      %s93 = ssub.s32 %s24, %s36
      %p94 = scmp.eq.s32.totalorder %s93, 0
      %s96 = sadd.s32 %s95, 1
      %s97 = scalar_select %p94, %s95, %s96
      %p100 = pneg %p94
      %p101 = scmp.eq.s32.totalorder %s17, 7
      %p102 = por %p100, %p101
      %p103 = scmp.ne.s32.totalorder %s95, %s98
      %p104 = scmp.eq.s32.totalorder %s17, 0
      %p105 = por %p103, %p104
      %p106 = scmp.ne.s32.totalorder %s95, %s98
      %p107 = scmp.eq.s32.totalorder %s22, 7
      %p108 = por %p106, %p107
      %p109 = scmp.ne.s32.totalorder %s98, %s99
      %p110 = scmp.eq.s32.totalorder %s22, 0
      %p111 = por %p109, %p110
      %p112 = scmp.ne.s32.totalorder %s98, %s99
      %p113 = scmp.eq.s32.totalorder %s23, 7
      %p114 = por %p112, %p113
      %p116 = scmp.ne.s32.totalorder %s99, %s115
      %p117 = scmp.eq.s32.totalorder %s23, 0
      %p118 = por %p116, %p117
      %p119 = scmp.le.s32.totalorder 1, %s17
      %p120 = scmp.lt.s32.totalorder %s17, 9
      %p121 = pnand %p119, %p120
      %p122 = pneg %p121
      // Predicated region
      $region9: #{tpu_custom_call.1} parent=5 // pred_check
        _
      $region10: #{tpu_custom_call.1} parent=5 // pred_check_branch
        %124 = sbr.rel (%p121) target = $region12
      $region11: #{tpu_custom_call.1} parent=5 // pred_region
        %s125 = ssub.s32 %s17, 1
      $region12: #{tpu_custom_call.1} parent=5 // pred_fallthru
        _
      %p126 = scmp.lt.s32.totalorder %s17, 8
      // Predicated region
      $region13: #{tpu_custom_call.1} parent=5 // pred_check
        %p127 = pneg %p126
      $region14: #{tpu_custom_call.1} parent=5 // pred_check_branch
        %129 = sbr.rel (%p127) target = $region16
      $region15: #{tpu_custom_call.1} parent=5 // pred_region
        // Predicated region
        $region17: #{tpu_custom_call.1} parent=15 // pred_check
          %p130 = pneg %p51
        $region18: #{tpu_custom_call.1} parent=15 // pred_check_branch
          %132 = sbr.rel (%p130) target = $region20
        $region19: #{tpu_custom_call.1} parent=15 // pred_region
          %s133 = sand.u32 %s41, 1
          %s134 = scalar_lea.sflag [#allocation3], %s133
          %s135 = sand.u32 %s41, 1
          %s136 = smul.addr %s135, 8
          %s137 = scalar_lea.vmem [#allocation2], %s136
          %139 = vsyncadd %s134, 0
          %s140 = sadd.s32 %s25, %s24
          %s141 = smul.addr %s140, 8
          %s142 = scalar_lea.hbm %s0, %s141
          %s144 = sshll.u32 %s142, 4
          %s145 = int_to_ptr.hbm [resolvable:$true] %s144
          %s146 = sshll.u32 %s137, 4
          %s147 = int_to_ptr.vmem [resolvable:$true] %s146
          %149 = dma.hbm_to_vmem [thread:$0]  %s145, 128, %s147, %s134
        $region20: #{tpu_custom_call.1} parent=15 // pred_fallthru
          _
        // Predicated region
        $region21: #{tpu_custom_call.1} parent=15 // pred_check
          %p150 = pneg %p79
        $region22: #{tpu_custom_call.1} parent=15 // pred_check_branch
          %152 = sbr.rel (%p150) target = $region24
        $region23: #{tpu_custom_call.1} parent=15 // pred_region
          %s153 = sand.u32 %s69, 1
          %s154 = scalar_lea.sflag [#allocation6], %s153
          %s155 = sand.u32 %s69, 1
          %s156 = smul.addr %s155, 8
          %s157 = scalar_lea.vmem [#allocation5], %s156
          %159 = vsyncadd %s154, 0
          %s160 = sadd.s32 %s25, %s24
          %s161 = smul.addr %s160, 8
          %s162 = scalar_lea.hbm %s1, %s161
          %s164 = sshll.u32 %s162, 4
          %s165 = int_to_ptr.hbm [resolvable:$true] %s164
          %s166 = sshll.u32 %s157, 4
          %s167 = int_to_ptr.vmem [resolvable:$true] %s166
          %169 = dma.hbm_to_vmem [thread:$0]  %s165, 128, %s167, %s154
        $region24: #{tpu_custom_call.1} parent=15 // pred_fallthru
          _
      $region16: #{tpu_custom_call.1} parent=5 // pred_fallthru
        _
      %p170 = scmp.le.s32.totalorder 1, %s17
      %p171 = scmp.lt.s32.totalorder %s17, 9
      %p172 = pnand %p170, %p171
      %p173 = pneg %p172
      // Predicated region
      $region25: #{tpu_custom_call.1} parent=5 // pred_check
        _
      $region26: #{tpu_custom_call.1} parent=5 // pred_check_branch
        %175 = sbr.rel (%p172) target = $region28
      $region27: #{tpu_custom_call.1} parent=5 // pred_region
        %s176 = ssub.s32 %s17, 1
        %s177 = sand.u32 %s44, 1
        %s178 = scalar_lea.sflag [#allocation3], %s177
        %s179 = sand.u32 %s44, 1
        %s180 = smul.addr %s179, 8
        %s181 = scalar_lea.vmem [#allocation2], %s180
        // Predicated region
        $region29: #{tpu_custom_call.1} parent=27 // pred_check
          %p182 = pneg %p57
        $region30: #{tpu_custom_call.1} parent=27 // pred_check_branch
          %184 = sbr.rel (%p182) target = $region32
        $region31: #{tpu_custom_call.1} parent=27 // pred_region
          %186 = dma.done %s178, 128
        $region32: #{tpu_custom_call.1} parent=27 // pred_fallthru
          _
        %s187 = sand.u32 %s72, 1
        %s188 = scalar_lea.sflag [#allocation6], %s187
        %s189 = sand.u32 %s72, 1
        %s190 = smul.addr %s189, 8
        %s191 = scalar_lea.vmem [#allocation5], %s190
        // Predicated region
        $region33: #{tpu_custom_call.1} parent=27 // pred_check
          %p192 = pneg %p85
        $region34: #{tpu_custom_call.1} parent=27 // pred_check_branch
          %194 = sbr.rel (%p192) target = $region36
        $region35: #{tpu_custom_call.1} parent=27 // pred_region
          %196 = dma.done %s188, 128
        $region36: #{tpu_custom_call.1} parent=27 // pred_fallthru
          _
        %s197 = sand.u32 %s44, 1
        %s198 = scalar_lea.sflag [#allocation3], %s197
        %s199 = sand.u32 %s44, 1
        %s200 = smul.addr %s199, 8
        %s201 = scalar_lea.vmem [#allocation2], %s200
        %p202 = pneg %p57
        %p203 = pneg %p54
        %s204 = sand.u32 %s72, 1
        %s205 = scalar_lea.sflag [#allocation6], %s204
        %s206 = sand.u32 %s72, 1
        %s207 = smul.addr %s206, 8
        %s208 = scalar_lea.vmem [#allocation5], %s207
        %p209 = pneg %p85
        %p210 = pneg %p82
        %p211 = pneg %p111
        %p212 = pneg %p108
        %s213 = sand.u32 %s98, 1
        %s214 = scalar_lea.sflag [#allocation4], %s213
        %s215 = sand.u32 %s98, 1
        %s216 = smul.addr %s215, 8
        %s217 = scalar_lea.vmem [#allocation7], %s216
        %p218 = scmp.eq.s32.totalorder %s27, 0
        // Predicated region
        $region37: #{tpu_custom_call.1} parent=27 // pred_check
          %p219 = pneg %p218
        $region38: #{tpu_custom_call.1} parent=27 // pred_check_branch
          %221 = sbr.rel (%p219) target = $region40
        $region39: #{tpu_custom_call.1} parent=27 // pred_region
          %222 = vst [vmem:[%s217] sm:$0xff] 0.0
        $region40: #{tpu_custom_call.1} parent=27 // pred_fallthru
          _
        %v223 = vld [vmem:[%s181] sm:$0xff]
        %v224 = vld [vmem:[%s191] sm:$0xff]
        %vm225 = vcmp.ge.s32.totalorder %v224, 1
        %vm226 = vcmp.le.s32.totalorder %v224, 4
        %vm227 = vmand %vm225, %vm226
        %v228 = vsel %vm227, %v223, 0.0
        %v229 = vrot.slane %v223, 4
        %v230 = vadd.f32 %v223, %v229
        %v231 = vrot.slane %v230, 2
        %v232 = vadd.f32 %v230, %v231
        %v233 = vrot.slane %v232, 1
        %v234 = vadd.f32 %v232, %v233
        %v235 = vrot.slane %v228, 4
        %v236 = vadd.f32 %v228, %v235
        %v237 = vrot.slane %v236, 2
        %v238 = vadd.f32 %v236, %v237
        %v239 = vrot.slane %v238, 1
        %v240 = vadd.f32 %v238, %v239
        %vm241 = vcmp.eq.s32.totalorder %v224, 1
        %v242 = vsel %vm241, 1.0, 0.0
        %v243 = vrot.slane %v242, 4
        %v244 = vadd.f32 %v242, %v243
        %v245 = vrot.slane %v244, 2
        %v246 = vadd.f32 %v244, %v245
        %v247 = vrot.slane %v246, 1
        %v248 = vadd.f32 %v246, %v247
        %vm249 = vcmp.eq.s32.totalorder %v224, 2
        %v250 = vsel %vm249, 1.0, 0.0
        %v251 = vrot.slane %v250, 4
        %v252 = vadd.f32 %v250, %v251
        %v253 = vrot.slane %v252, 2
        %v254 = vadd.f32 %v252, %v253
        %v255 = vrot.slane %v254, 1
        %v256 = vadd.f32 %v254, %v255
        %vm257 = vcmp.eq.s32.totalorder %v224, 3
        %v258 = vsel %vm257, 1.0, 0.0
        %v259 = vrot.slane %v258, 4
        %v260 = vadd.f32 %v258, %v259
        %v261 = vrot.slane %v260, 2
        %v262 = vadd.f32 %v260, %v261
        %v263 = vrot.slane %v262, 1
        %v264 = vadd.f32 %v262, %v263
        %vm265 = vcmp.eq.s32.totalorder %v224, 4
        %v266 = vsel %vm265, 1.0, 0.0
        %v267 = vrot.slane %v266, 4
        %v268 = vadd.f32 %v266, %v267
        %v269 = vrot.slane %v268, 2
        %v270 = vadd.f32 %v268, %v269
        %v271 = vrot.slane %v270, 1
        %v272 = vadd.f32 %v270, %v271
        %vm273 = vcmask 1040384
        %v274 = vsel %vm273, %v234, %v240
        %vm275 = vcmask 1041408
        %v276 = vsel %vm275, %v274, %v248
        %vm277 = vcmask 1042432
        %v278 = vsel %vm277, %v276, %v256
        %vm279 = vcmask 1043456
        %v280 = vsel %vm279, %v278, %v264
        %vm281 = vcmask 1044480
        %v282 = vsel %vm281, %v280, %v272
        %vm283 = vcmask 1045504
        %v284 = vsel %vm283, %v282, 0.0
        %v285 = vld [vmem:[%s217] sm:$0xff]
        %v286 = vadd.f32 %v285, %v284
        %287 = vst [vmem:[%s217] sm:$0xff] %v286
        %s288 = sand.u32 %s98, 1
        %s289 = scalar_lea.sflag [#allocation4], %s288
        %s290 = sand.u32 %s98, 1
        %s291 = smul.addr %s290, 8
        %s292 = scalar_lea.vmem [#allocation7], %s291
        // Predicated region
        $region41: #{tpu_custom_call.1} parent=27 // pred_check
          %p293 = pneg %p108
        $region42: #{tpu_custom_call.1} parent=27 // pred_check_branch
          %295 = sbr.rel (%p293) target = $region44
        $region43: #{tpu_custom_call.1} parent=27 // pred_region
          %297 = vsyncadd %s289, 0
          %s298 = smul.addr %s26, 8
          %s299 = scalar_lea.hbm %s2, %s298
          %s301 = sshll.u32 %s292, 4
          %s302 = int_to_ptr.vmem [resolvable:$true] %s301
          %s303 = sshll.u32 %s299, 4
          %s304 = int_to_ptr.hbm [resolvable:$true] %s303
          %306 = dma.vmem_to_hbm [thread:$0]  %s302, 128, %s304, %s289
        $region44: #{tpu_custom_call.1} parent=27 // pred_fallthru
          _
      $region28: #{tpu_custom_call.1} parent=5 // pred_fallthru
        _
      %p307 = scmp.le.s32.totalorder 2, %s17
      // Predicated region
      $region45: #{tpu_custom_call.1} parent=5 // pred_check
        %p308 = pneg %p307
      $region46: #{tpu_custom_call.1} parent=5 // pred_check_branch
        %310 = sbr.rel (%p308) target = $region48
      $region47: #{tpu_custom_call.1} parent=5 // pred_region
        %s311 = ssub.s32 %s17, 2
        // Predicated region
        $region49: #{tpu_custom_call.1} parent=47 // pred_check
          %p312 = pneg %p114
        $region50: #{tpu_custom_call.1} parent=47 // pred_check_branch
          %314 = sbr.rel (%p312) target = $region52
        $region51: #{tpu_custom_call.1} parent=47 // pred_region
          %s315 = sand.u32 %s99, 1
          %s316 = scalar_lea.sflag [#allocation4], %s315
          %s317 = sand.u32 %s99, 1
          %s318 = smul.addr %s317, 8
          %s319 = scalar_lea.vmem [#allocation7], %s318
          %321 = dma.done %s316, 128
        $region52: #{tpu_custom_call.1} parent=47 // pred_fallthru
          _
      $region48: #{tpu_custom_call.1} parent=5 // pred_fallthru
        _
    $region6: #{tpu_custom_call.1} parent=1 // loop_footer
      %s21 = sadd.s32 1, %s17
    $region7: #{tpu_custom_call.1} parent=1 // loop_footer_branch
      %16 = sbr.rel target = $region3
    $region8: #{tpu_custom_call.1} parent=1 // loop_exit
      _
    %322 = vsyncpa [#allocation3], 1
    %s323 = scalar_lea.sflag [#allocation3], 1
    %324 = vsyncpa %s323, 1
    %325 = vsyncpa [#allocation6], 1
    %s326 = scalar_lea.sflag [#allocation6], 1
    %327 = vsyncpa %s326, 1
    %328 = vsyncpa [#allocation4], 1
    %s329 = scalar_lea.sflag [#allocation4], 1
    %330 = vsyncpa %s329, 1

</llo_original>
